<compile_context>
chip_gen: v7x
topology: tpu7x:2x2x1
jax: 0.10.0
libtpu: 0.0.40
codegen_flags: <defaults>
</compile_context>

<pallas_src>
import functools
import math

import jax
import jax.numpy as jnp
from jax.experimental import pallas as pl
from jax.experimental.pallas import tpu as pltpu


def _round_up(a, b):
    return (a + b - 1) // b * b


def _label_smoothing_kernel(x_ref, tgt_ref, td_ref, loss_ref, *,
                            valid_v, padding_idx, tile_v,
                            confidence, smooth_val, conf_tlogt, smooth_tlogt):
    # x_ref: (TN, TV) log-probs, tgt_ref: (TN, 1) i32, td_ref: (TN, TV),
    # loss_ref: (8, 128) per-tile partial-loss block.
    j = pl.program_id(1)
    x = x_ref[...].astype(jnp.float32)
    tgt = tgt_ref[...]                                    # (TN, 1)
    tn, tv = x.shape

    # Global column index for this V-tile.
    col = j * tile_v + jax.lax.broadcasted_iota(jnp.int32, (tn, tv), 1)
    is_tgt = col == tgt
    # Zero wherever: row's target is padding_idx, column is padding_idx,
    # or column is vocab padding (col >= V).
    zero_mask = (tgt == padding_idx) | (col == padding_idx) | (col >= valid_v)

    # true_dist: fill(smooth_val) -> scatter(confidence) -> zero masks.
    td = jnp.where(is_tgt, jnp.float32(confidence), jnp.float32(smooth_val))
    td = jnp.where(zero_mask, jnp.float32(0.0), td)
    td_ref[...] = td.astype(td_ref.dtype)

    # KLDivLoss(reduction='sum') term t*(log t - x); t has only 3 values so
    # t*log t is a compile-time constant per branch (no jnp.log in the kernel).
    contrib = jnp.where(
        is_tgt,
        jnp.float32(conf_tlogt) - jnp.float32(confidence) * x,
        jnp.float32(smooth_tlogt) - jnp.float32(smooth_val) * x)
    contrib = jnp.where(zero_mask, jnp.float32(0.0), contrib)
    partial = jnp.sum(contrib)

    # Lane-dense (8,128) partial-loss block: partial at [0,0], zeros elsewhere.
    r = jax.lax.broadcasted_iota(jnp.int32, loss_ref.shape, 0)
    c = jax.lax.broadcasted_iota(jnp.int32, loss_ref.shape, 1)
    loss_ref[...] = jnp.where((r == 0) & (c == 0), partial, jnp.float32(0.0))


def label_smoothing_forward(x, target, *, size, padding_idx, smoothing,
                            tile_n=512, tile_v=2048):
    """Returns (loss_scalar, true_dist) matching the PyTorch module forward."""
    N, V = x.shape
    assert V == size, "x.size(1) must equal self.size"

    confidence = 1.0 - smoothing
    smooth_val = smoothing / (size - 2)
    conf_tlogt = confidence * math.log(confidence) if confidence > 0.0 else 0.0
    smooth_tlogt = smooth_val * math.log(smooth_val) if smooth_val > 0.0 else 0.0

    # Tile sizes: (8,128)-aligned, clamped to the (padded) array extent.
    # Defaults (512, 2048) f32 ~= 4 MiB/tile -> ~16-18 MiB double-buffered,
    # safe within v7x's 64 MiB physical VMEM.
    TN = min(tile_n, _round_up(N, 8))
    TV = min(tile_v, _round_up(V, 128))
    N_pad = _round_up(N, TN)
    V_pad = _round_up(V, TV)
    grid = (N_pad // TN, V_pad // TV)

    x_p = x
    if (N_pad, V_pad) != (N, V):
        x_p = jnp.pad(x, ((0, N_pad - N), (0, V_pad - V)))
    tgt = target.astype(jnp.int32)
    if N_pad != N:
        # Padded rows get target = padding_idx -> whole row of true_dist is 0,
        # so they contribute nothing to the loss.
        tgt = jnp.pad(tgt, (0, N_pad - N), constant_values=padding_idx)
    tgt2d = tgt.reshape(N_pad, 1)

    kernel = functools.partial(
        _label_smoothing_kernel,
        valid_v=V, padding_idx=padding_idx, tile_v=TV,
        confidence=confidence, smooth_val=smooth_val,
        conf_tlogt=conf_tlogt, smooth_tlogt=smooth_tlogt)

    td_pad, loss_parts = pl.pallas_call(
        kernel,
        grid=grid,
        in_specs=[pl.BlockSpec((TN, TV), lambda i, j: (i, j)),   # x tile
                  pl.BlockSpec((TN, 1), lambda i, j: (i, 0))],   # target column
        out_specs=(pl.BlockSpec((TN, TV), lambda i, j: (i, j)),  # true_dist tile
                   pl.BlockSpec((8, 128), lambda i, j: (i, j))), # partial losses
        out_shape=(jax.ShapeDtypeStruct((N_pad, V_pad), x.dtype),
                   jax.ShapeDtypeStruct((grid[0] * 8, grid[1] * 128), jnp.float32)),
        compiler_params=pltpu.CompilerParams(
            dimension_semantics=("parallel", "parallel"),
            vmem_limit_bytes=48 * 1024 * 1024),
    )(x_p, tgt2d)

    loss = jnp.sum(loss_parts)        # tiny (grid_n*8, grid_v*128) reduce
    true_dist = td_pad[:N, :V]
    return loss, true_dist


def _reference(x, target, *, size, padding_idx, smoothing):
    N, V = x.shape
    x = x.astype(jnp.float32)
    confidence = 1.0 - smoothing
    td = jnp.full((N, V), smoothing / (size - 2), jnp.float32)
    td = td.at[jnp.arange(N), target].set(confidence)
    td = td.at[:, padding_idx].set(0.0)
    td = jnp.where((target == padding_idx)[:, None], 0.0, td)
    contrib = jnp.where(td > 0, td * (jnp.log(jnp.where(td > 0, td, 1.0)) - x), 0.0)
    return jnp.sum(contrib), td


def _run_case(key, N, V, padding_idx, smoothing, tile_n, tile_v):
    kx, kt = jax.random.split(key)
    logits = jax.random.normal(kx, (N, V), dtype=jnp.float32)
    x = jax.nn.log_softmax(logits, axis=-1)           # KLDivLoss expects log-probs
    target = jax.random.randint(kt, (N,), 0, V, dtype=jnp.int32)
    target = target.at[3].set(padding_idx)            # exercise padding-row mask

    loss, true_dist = label_smoothing_forward(
        x, target, size=V, padding_idx=padding_idx, smoothing=smoothing,
        tile_n=tile_n, tile_v=tile_v)
    jax.block_until_ready((loss, true_dist))

    ref_loss, ref_td = _reference(
        x, target, size=V, padding_idx=padding_idx, smoothing=smoothing)
    assert jnp.allclose(loss, ref_loss, rtol=1e-5, atol=1e-5), (loss, ref_loss)
    assert jnp.allclose(true_dist, ref_td, rtol=1e-6, atol=1e-6)


if __name__ == "__main__":
    key = jax.random.PRNGKey(0)
    k1, k2 = jax.random.split(key)

    # Case 1: small aligned-to-single-tile shape (8 tokens, vocab 32).
    _run_case(k1, N=8, V=32, padding_idx=0, smoothing=0.1,
              tile_n=512, tile_v=2048)

    # Case 2: non-aligned shape with small tiles to exercise the multi-tile grid
    # (grid = (3, 3)) and the N/V padding masks.
    _run_case(k2, N=24, V=300, padding_idx=0, smoothing=0.1,
              tile_n=8, tile_v=128)

    print("KERNEL_OK")
</pallas_src>

<mosaic_0001>
module attributes {stable_mosaic.version = 11 : i64} {
  func.func @_label_smoothing_kernel(%arg0: i32, %arg1: i32, %arg2: memref<8x128xf32, #tpu.memory_space<vmem>>, %arg3: memref<8x1xi32, #tpu.memory_space<vmem>>, %arg4: memref<8x128xf32, #tpu.memory_space<vmem>>, %arg5: memref<8x128xf32, #tpu.memory_space<vmem>>) attributes {dimension_semantics = [#tpu.dimension_semantics<parallel>, #tpu.dimension_semantics<parallel>], iteration_bounds = array<i64: 1, 1>, scalar_prefetch = 0 : i64, scratch_operands = 0 : i64, tpu.core_type = #tpu.core_type<tc>, window_params = [{transform_indices = @transform_0, window_bounds = array<i64: 8, 128>}, {transform_indices = @transform_1, window_bounds = array<i64: 8, 1>}, {transform_indices = @transform_2, window_bounds = array<i64: 8, 128>}, {transform_indices = @transform_3, window_bounds = array<i64: 8, 128>}]} {
    %c0 = arith.constant 0 : index
    %c0_0 = arith.constant 0 : index
    %0 = vector.load %arg2[%c0, %c0_0] : memref<8x128xf32, #tpu.memory_space<vmem>>, vector<8x128xf32>
    %c0_1 = arith.constant 0 : index
    %c0_2 = arith.constant 0 : index
    %1 = vector.load %arg3[%c0_1, %c0_2] : memref<8x1xi32, #tpu.memory_space<vmem>>, vector<8x1xi32>
    %c128_i32 = arith.constant 128 : i32
    %2 = arith.muli %arg1, %c128_i32 : i32
    %3 = tpu.iota {dimensions = array<i32: 1>} : vector<8x128xi32>
    %4 = vector.broadcast %2 : i32 to vector<8x128xi32>
    %5 = arith.addi %4, %3 : vector<8x128xi32>
    %6 = vector.broadcast %1 : vector<8x1xi32> to vector<8x128xi32>
    %7 = arith.cmpi eq, %5, %6 : vector<8x128xi32>
    %c0_i32 = arith.constant 0 : i32
    %8 = vector.broadcast %c0_i32 : i32 to vector<8x1xi32>
    %9 = arith.cmpi eq, %1, %8 : vector<8x1xi32>
    %c0_i32_3 = arith.constant 0 : i32
    %10 = vector.broadcast %c0_i32_3 : i32 to vector<8x128xi32>
    %11 = arith.cmpi eq, %5, %10 : vector<8x128xi32>
    %12 = vector.broadcast %9 : vector<8x1xi1> to vector<8x128xi1>
    %13 = arith.ori %12, %11 : vector<8x128xi1>
    %c32_i32 = arith.constant 32 : i32
    %14 = vector.broadcast %c32_i32 : i32 to vector<8x128xi32>
    %15 = arith.cmpi sge, %5, %14 : vector<8x128xi32>
    %16 = arith.ori %13, %15 : vector<8x128xi1>
    %cst = arith.constant 0.899999976 : f32
    %cst_4 = arith.constant 0.00333333341 : f32
    %17 = vector.broadcast %cst : f32 to vector<8x128xf32>
    %18 = vector.broadcast %cst_4 : f32 to vector<8x128xf32>
    %19 = arith.select %7, %17, %18 : vector<8x128xi1>, vector<8x128xf32>
    %cst_5 = arith.constant 0.000000e+00 : f32
    %20 = vector.broadcast %cst_5 : f32 to vector<8x128xf32>
    %21 = arith.select %16, %20, %19 : vector<8x128xi1>, vector<8x128xf32>
    %c0_6 = arith.constant 0 : index
    %c0_7 = arith.constant 0 : index
    %22 = vector.load %arg4[%c0_6, %c0_7] : memref<8x128xf32, #tpu.memory_space<vmem>>, vector<8x128xf32>
    tpu.vector_store %arg4[%c0_6, %c0_7], %21 {strides = array<i32>} : memref<8x128xf32, #tpu.memory_space<vmem>>, vector<8x128xf32>,
    %cst_8 = arith.constant 0.899999976 : f32
    %23 = vector.broadcast %cst_8 : f32 to vector<8x128xf32>
    %24 = arith.mulf %23, %0 : vector<8x128xf32>
    %cst_9 = arith.constant -0.0948244631 : f32
    %25 = vector.broadcast %cst_9 : f32 to vector<8x128xf32>
    %26 = arith.subf %25, %24 : vector<8x128xf32>
    %cst_10 = arith.constant 0.00333333341 : f32
    %27 = vector.broadcast %cst_10 : f32 to vector<8x128xf32>
    %28 = arith.mulf %27, %0 : vector<8x128xf32>
    %cst_11 = arith.constant -0.0190126076 : f32
    %29 = vector.broadcast %cst_11 : f32 to vector<8x128xf32>
    %30 = arith.subf %29, %28 : vector<8x128xf32>
    %31 = arith.select %7, %26, %30 : vector<8x128xi1>, vector<8x128xf32>
    %cst_12 = arith.constant 0.000000e+00 : f32
    %32 = vector.broadcast %cst_12 : f32 to vector<8x128xf32>
    %33 = arith.select %16, %32, %31 : vector<8x128xi1>, vector<8x128xf32>
    %34 = vector.shape_cast %33 : vector<8x128xf32> to vector<1x8x128xf32>
    %cst_13 = arith.constant dense<0.000000e+00> : vector<1xf32>
    %35 = vector.multi_reduction <add>, %34, %cst_13 [1, 2] : vector<1x8x128xf32> to vector<1xf32>
    %36 = vector.shape_cast %35 : vector<1xf32> to vector<1x1x1xf32>
    %37 = vector.extract %36[0, 0, 0] : f32 from vector<1x1x1xf32>
    %38 = tpu.iota {dimensions = array<i32: 0>} : vector<8x128xi32>
    %39 = tpu.iota {dimensions = array<i32: 1>} : vector<8x128xi32>
    %c0_i32_14 = arith.constant 0 : i32
    %40 = vector.broadcast %c0_i32_14 : i32 to vector<8x128xi32>
    %41 = arith.cmpi eq, %38, %40 : vector<8x128xi32>
    %c0_i32_15 = arith.constant 0 : i32
    %42 = vector.broadcast %c0_i32_15 : i32 to vector<8x128xi32>
    %43 = arith.cmpi eq, %39, %42 : vector<8x128xi32>
    %44 = arith.andi %41, %43 : vector<8x128xi1>
    %cst_16 = arith.constant 0.000000e+00 : f32
    %45 = vector.broadcast %37 : f32 to vector<8x128xf32>
    %46 = vector.broadcast %cst_16 : f32 to vector<8x128xf32>
    %47 = arith.select %44, %45, %46 : vector<8x128xi1>, vector<8x128xf32>
    %c0_17 = arith.constant 0 : index
    %c0_18 = arith.constant 0 : index
    %48 = vector.load %arg5[%c0_17, %c0_18] : memref<8x128xf32, #tpu.memory_space<vmem>>, vector<8x128xf32>
    tpu.vector_store %arg5[%c0_17, %c0_18], %47 {strides = array<i32>} : memref<8x128xf32, #tpu.memory_space<vmem>>, vector<8x128xf32>,
    return
  }
  func.func @transform_0(%arg0: i32, %arg1: i32) -> (i32, i32) {
    %c0_i32 = arith.constant 0 : i32
    return %arg0, %arg1 : i32, i32
  }
  func.func @transform_1(%arg0: i32, %arg1: i32) -> (i32, i32) {
    %c0_i32 = arith.constant 0 : i32
    %c0_i32_0 = arith.constant 0 : i32
    return %arg0, %c0_i32 : i32, i32
  }
  func.func @transform_2(%arg0: i32, %arg1: i32) -> (i32, i32) {
    %c0_i32 = arith.constant 0 : i32
    return %arg0, %arg1 : i32, i32
  }
  func.func @transform_3(%arg0: i32, %arg1: i32) -> (i32, i32) {
    %c0_i32 = arith.constant 0 : i32
    return %arg0, %arg1 : i32, i32
  }
}

</mosaic_0001>

<llo_original>
// kernel: tpu_custom_call.1
$region0: #{tpu_custom_call.1}
  #allocation0 [shape = 'u32[]', space=smem, size = 0x4, offset = 0x4, fixed_abs, tag = 'smem constant byte address 0x4 - core index']
  #allocation1 [shape = 'u32[144,128]{1,0:T(1,128)}', space=vmem, size = 0x12000, scoped, tag = 'internal scratch']
  %s0 = inlined_call_operand.vmem [shape: f32[8,128], index: 0, kind: input, shape index: {}]
  %s1 = inlined_call_operand.vmem [shape: s32[8,1], index: 1, kind: input, shape index: {}]
  %s2 = inlined_call_operand.hbm [shape: f32[8,128], index: 2, kind: output, shape index: {0}]
  %s3 = inlined_call_operand.hbm [shape: f32[8,128], index: 3, kind: output, shape index: {1}]
  %4 = xla_tuple %s2, %s3
  %s5 = sld [smem:[#allocation0]]
  $region26: #{tpu_custom_call.1} parent=0
    _
  %s7 = ssub.s32 1, %s5
  %s8 = scalar_select 0, %s7, %s5
  $region1: #{tpu_custom_call.1} parent=0
    #allocation2 [shape = 'u8[4096]{0}', space=vmem, size = 0x1000, scoped, tag = 'output window, operand 0, single buffered']
    #allocation3 [shape = 's32[1]{0}', space=sflag, size = 0x4, scoped, tag = 'scoped memory for tpu_custom_call.1']
    #allocation4 [shape = 'u8[4096]{0}', space=vmem, size = 0x1000, scoped, tag = 'output window, operand 1, single buffered']
    #allocation5 [shape = 's32[1]{0}', space=sflag, size = 0x4, scoped, tag = 'scoped memory for tpu_custom_call.1']
    %9 = vsyncpa [#allocation3], 0
    %10 = vsyncpa [#allocation5], 0
    // Predicated region
    $region2: #{tpu_custom_call.1} parent=1 // pred_check
      _
    $region3: #{tpu_custom_call.1} parent=1 // pred_check_branch
      %12 = sbr.rel (0) target = $region5
    $region4: #{tpu_custom_call.1} parent=1 // pred_region
      _
    $region5: #{tpu_custom_call.1} parent=1 // pred_fallthru
      _
    // Predicated region
    $region6: #{tpu_custom_call.1} parent=1 // pred_check
      _
    $region7: #{tpu_custom_call.1} parent=1 // pred_check_branch
      %14 = sbr.rel (0) target = $region9
    $region8: #{tpu_custom_call.1} parent=1 // pred_region
      _
    $region9: #{tpu_custom_call.1} parent=1 // pred_fallthru
      _
    %v15 = vld [vmem:[%s0] sm:$0xff]
    %v16 = vld [vmem:[%s1] sm:$0xff]
    %s17 = smul.u32 0, 128
    %v18 = vlaneseq
    %v19 = vand.u32 %v18, 127
    %v20 = vstv %s17
    %v21 = vadd.s32 %v20, %v19
    %22 = vset.pattern.permute.xlu0 0
    %23 = vperm.xlu0 %22, %v16
    %v24 = vpop.permute.xlu0 %23
    %vm25 = vcmp.eq.s32.totalorder %v21, %v24
    %vm26 = vcmp.eq.s32.totalorder %v16, 0
    %vm27 = vcmp.eq.s32.totalorder %v21, 0
    %v28 = vsel %vm26, 1, 0
    %29 = vset.pattern.permute.xlu0 0
    %30 = vperm.xlu0 %29, %v28
    %v31 = vpop.permute.xlu0 %30
    %vm32 = vcmp.eq.s32.totalorder %v31, 1
    %vm33 = vmor %vm32, %vm27
    %vm34 = vcmp.ge.s32.totalorder %v21, 32
    %vm35 = vmor %vm33, %vm34
    %v36 = vsel %vm25, 0.9, 0.0033333334
    %v37 = vsel %vm35, 0.0, %v36
    %38 = vst [vmem:[#allocation2] sm:$0xff] %v37
    %v39 = vmul.f32 %v15, 0.9
    %v40 = vsub.f32 -0.09482446, %v39
    %v41 = vmul.f32 %v15, 0.0033333334
    %v42 = vsub.f32 -0.019012608, %v41
    %v43 = vsel %vm25, %v40, %v42
    %v44 = vsel %vm35, 0.0, %v43
    %45 = vadd.xlane.f32.xlu0 %v44
    %v46 = vpop.xlane.xlu0 %45
    %v47 = vrot.slane %v46, 4
    %v48 = vadd.f32 %v46, %v47
    %v49 = vrot.slane %v48, 2
    %v50 = vadd.f32 %v48, %v49
    %v51 = vrot.slane %v50, 1
    %v52 = vadd.f32 %v50, %v51
    %s53 = vtos %v52
    %v54 = vlaneseq
    %v55 = vshrl.u32 %v54, 7
    %vm56 = vcmp.eq.s32.totalorder %v55, 0
    %vm57 = vcmp.eq.s32.totalorder %v19, 0
    %vm58 = vmand %vm56, %vm57
    %v59 = vstv %s53
    %v60 = vsel %vm58, %v59, 0.0
    %61 = vst [vmem:[#allocation4] sm:$0xff] %v60
    // Predicated region
    $region10: #{tpu_custom_call.1} parent=1 // pred_check
      _
    $region11: #{tpu_custom_call.1} parent=1 // pred_check_branch
      %63 = sbr.rel (0) target = $region13
    $region12: #{tpu_custom_call.1} parent=1 // pred_region
      %s65 = ssub.s32 128, 128
      %66 = vsyncadd [#allocation3], %s65
      %s68 = sshll.u32 [#allocation2], 4
      %s69 = int_to_ptr.vmem [resolvable:$true] %s68
      %71 = dma.vmem_to_hbm [thread:$0]  %s69, 128, %s2, [#allocation3]
    $region13: #{tpu_custom_call.1} parent=1 // pred_fallthru
      _
    // Predicated region
    $region14: #{tpu_custom_call.1} parent=1 // pred_check
      _
    $region15: #{tpu_custom_call.1} parent=1 // pred_check_branch
      %73 = sbr.rel (0) target = $region17
    $region16: #{tpu_custom_call.1} parent=1 // pred_region
      %s75 = ssub.s32 128, 128
      %76 = vsyncadd [#allocation5], %s75
      %s78 = sshll.u32 [#allocation4], 4
      %s79 = int_to_ptr.vmem [resolvable:$true] %s78
      %81 = dma.vmem_to_hbm [thread:$0]  %s79, 128, %s3, [#allocation5]
    $region17: #{tpu_custom_call.1} parent=1 // pred_fallthru
      _
    // Predicated region
    $region18: #{tpu_custom_call.1} parent=1 // pred_check
      _
    $region19: #{tpu_custom_call.1} parent=1 // pred_check_branch
      %83 = sbr.rel (0) target = $region21
    $region20: #{tpu_custom_call.1} parent=1 // pred_region
      %84 = dma.done [#allocation3], 128
    $region21: #{tpu_custom_call.1} parent=1 // pred_fallthru
      _
    // Predicated region
    $region22: #{tpu_custom_call.1} parent=1 // pred_check
      _
    $region23: #{tpu_custom_call.1} parent=1 // pred_check_branch
      %86 = sbr.rel (0) target = $region25
    $region24: #{tpu_custom_call.1} parent=1 // pred_region
      %87 = dma.done [#allocation5], 128
    $region25: #{tpu_custom_call.1} parent=1 // pred_fallthru
      _
    %88 = vsyncpa [#allocation3], 1
    %89 = vsyncpa [#allocation5], 1

</llo_original>
